<compile_context>
chip_gen: v6e
topology: v6e:2x2x1
jax: 0.10.0
libtpu: 0.0.40
codegen_flags: <defaults>
</compile_context>

<pallas_src>
import jax
import jax.numpy as jnp
from jax.experimental import pallas as pl
from jax.experimental.pallas import tpu as pltpu

OH = OW = 16          # conv output spatial: (32 + 2*3 - 7)//2 + 1
PH = PW = 8           # pooled output spatial
C_OUT = 64
K_REAL = 7 * 7 * 3    # 147
K_PAD = 160           # contraction dim padded (147 real + 1 bias column + zeros) to mult. of 16


# ---------------------------------------------------------------------------
# Fused kernel: conv (im2col matmul, BN scale+bias folded in) + ReLU + 3x3/2 maxpool.
# One grid step == `imgs` images.
#   p_ref: (imgs*256, 160) bf16   im2col patches (+ ones column), rows ordered (img, h, w)
#   w_ref: (160, 64)       bf16   conv weights with BN scale folded; row 147 = BN bias
#   o_ref: (imgs, 8, 512)  f32    pooled output, lane-dense: last dim = (w_out, c) flattened
# ---------------------------------------------------------------------------
def conv_bn_relu_pool_kernel(p_ref, w_ref, o_ref):
    imgs = o_ref.shape[0]

    # 7x7 conv + BN (scale in weights, bias via ones column) as a single MXU matmul (f32 acc).
    acc = jnp.dot(p_ref[...], w_ref[...], preferred_element_type=jnp.float32)   # (imgs*256, 64)
    y = jnp.maximum(acc, 0.0).reshape(imgs, OH, OW, C_OUT)                      # ReLU, (.,H,W,C)

    # ---- fused 3x3, stride-2, pad-1 max pool ----
    # Post-ReLU values are >= 0, so zero padding is exactly equivalent to -inf padding.
    # Row (H) pass: leading-axis ops only (no relayout), fully vectorized.
    zr = jnp.zeros((imgs, 1, OW, C_OUT), jnp.float32)
    yp = jnp.concatenate([zr, y, zr], axis=1).reshape(imgs, PH + 1, 2, OW, C_OUT)
    pair = jnp.maximum(yp[:, :, 0], yp[:, :, 1])          # padded rows {2i, 2i+1}
    rmax = jnp.maximum(pair[:, :PH], yp[:, 1:, 0])        # + row {2i+2} -> (imgs, 8, 16, 64)

    # Column (W) pass: two full-tile shifted maxima (sublane-offset slices), then assemble
    # the pooled tile lane-dense (last dim PW*C = 512) for a single unmasked full-lane store.
    m1 = jnp.maximum(rmax[:, :, :OW - 1], rmax[:, :, 1:])   # max over cols {c, c+1}
    m2 = jnp.maximum(m1[:, :, :OW - 2], rmax[:, :, 2:])     # max over cols {c, c+1, c+2}
    # output col 0 covers input cols {0,1} (col -1 is zero padding); col j>=1 covers {2j-1,2j,2j+1}
    pieces = [m1[:, :, 0]] + [m2[:, :, 2 * j - 1] for j in range(1, PW)]   # each (imgs, 8, 64)
    o_ref[...] = jnp.concatenate(pieces, axis=-1)                          # (imgs, 8, 512)


# ---------------------------------------------------------------------------
# Wrapper (layout plumbing, patch extraction, BN folding)
# ---------------------------------------------------------------------------
def new_model_forward(x_nchw, conv_w, gamma, beta, run_mean, run_var, eps=1e-5):
    N = x_nchw.shape[0]

    # Fold eval-mode BN: scale into the conv weights, bias as an extra contraction row.
    scale = gamma / jnp.sqrt(run_var + eps)                               # (64,)
    bias_row = (beta - run_mean * scale).reshape(1, C_OUT)                # (1, 64)

    dn = ("NCHW", "OIHW", "NCHW")
    hi = jax.lax.Precision.HIGHEST

    # im2col of the input: (N, 147, 16, 16) -> rows ordered (n, h, w), cols in patches order.
    P = jax.lax.conv_general_dilated_patches(
        x_nchw.astype(jnp.float32), filter_shape=(7, 7), window_strides=(2, 2),
        padding=((3, 3), (3, 3)), dimension_numbers=dn, precision=hi)
    P = jnp.transpose(P, (0, 2, 3, 1)).reshape(N * OH * OW, K_REAL)

    # Flatten the conv weights with the SAME patches op, so the K ordering matches P exactly.
    Wp = jax.lax.conv_general_dilated_patches(
        conv_w.astype(jnp.float32), filter_shape=(7, 7), window_strides=(1, 1),
        padding="VALID", dimension_numbers=dn, precision=hi)              # (64, 147, 1, 1)
    w2 = Wp.reshape(C_OUT, K_REAL).T * scale[None, :]                     # (147, 64), scale folded

    # Append the bias row / ones column, zero-pad K to 160, cast to bf16 for the MXU.
    w2 = jnp.concatenate([w2, bias_row], axis=0)                          # (148, 64)
    w2 = jnp.pad(w2, ((0, K_PAD - K_REAL - 1), (0, 0))).astype(jnp.bfloat16)
    P = jnp.concatenate([P, jnp.ones((P.shape[0], 1), P.dtype)], axis=1)  # (N*256, 148)
    P = jnp.pad(P, ((0, 0), (0, K_PAD - K_REAL - 1))).astype(jnp.bfloat16)

    # Grid partitioning: keep 2 parallel steps (one per v7x TensorCore) and batch the rest
    # of the images into each step to amortize per-step overhead (no-op at N=2).
    imgs_per_step = max(1, pl.cdiv(N, 2))
    n_steps = pl.cdiv(N, imgs_per_step)
    n_pad = n_steps * imgs_per_step
    if n_pad != N:
        P = jnp.pad(P, ((0, (n_pad - N) * OH * OW), (0, 0)))

    TM = imgs_per_step * OH * OW   # patch rows per grid step

    pooled = pl.pallas_call(
        conv_bn_relu_pool_kernel,
        out_shape=jax.ShapeDtypeStruct((n_pad, PH, PW * C_OUT), jnp.float32),
        grid_spec=pltpu.PrefetchScalarGridSpec(
            num_scalar_prefetch=0,
            grid=(n_steps,),
            in_specs=[
                pl.BlockSpec((TM, K_PAD), lambda b: (b, 0)),
                pl.BlockSpec((K_PAD, C_OUT), lambda b: (0, 0)),
            ],
            out_specs=pl.BlockSpec((imgs_per_step, PH, PW * C_OUT), lambda b: (b, 0, 0)),
        ),
        compiler_params=pltpu.CompilerParams(dimension_semantics=("parallel",)),
    )(P, w2)

    # kernel output lane dim is (w_out, c) flattened -> (N, H, W, C) -> NCHW
    out = pooled[:N].reshape(N, PH, PW, C_OUT)
    return jnp.transpose(out, (0, 3, 1, 2))


# ---------------------------------------------------------------------------
# Pure-JAX reference (sanity check)
# ---------------------------------------------------------------------------
def reference_forward(x, conv_w, gamma, beta, run_mean, run_var, eps=1e-5):
    y = jax.lax.conv_general_dilated(
        x, conv_w, window_strides=(2, 2), padding=((3, 3), (3, 3)),
        dimension_numbers=("NCHW", "OIHW", "NCHW"),
        precision=jax.lax.Precision.HIGHEST)
    scale = gamma / jnp.sqrt(run_var + eps)
    bias = beta - run_mean * scale
    y = y * scale[None, :, None, None] + bias[None, :, None, None]
    y = jnp.maximum(y, 0.0)
    y = jax.lax.reduce_window(
        y, -jnp.inf, jax.lax.max,
        window_dimensions=(1, 1, 3, 3), window_strides=(1, 1, 2, 2),
        padding=((0, 0), (0, 0), (1, 1), (1, 1)))
    return y


if __name__ == "__main__":
    key = jax.random.PRNGKey(0)
    kw, kg, kb, km, kv, kx = jax.random.split(key, 6)

    # Deterministic synthetic parameters (ResNet-50 stem shapes).
    conv_w = jax.random.normal(kw, (64, 3, 7, 7), jnp.float32) * 0.05
    gamma = 1.0 + 0.1 * jax.random.normal(kg, (64,), jnp.float32)
    beta = 0.1 * jax.random.normal(kb, (64,), jnp.float32)
    run_mean = 0.1 * jax.random.normal(km, (64,), jnp.float32)
    run_var = 0.5 + jnp.abs(jax.random.normal(kv, (64,), jnp.float32))

    x = jax.random.normal(kx, (2, 3, 32, 32), jnp.float32)   # NCHW input

    fwd = jax.jit(new_model_forward)
    out = jax.block_until_ready(fwd(x, conv_w, gamma, beta, run_mean, run_var))

    ref = reference_forward(x, conv_w, gamma, beta, run_mean, run_var)
    assert out.shape == (2, 64, 8, 8), out.shape
    # bf16 MXU inputs (weights, patches, folded bias) with f32 accumulation:
    # expected max |err| ~5e-3 at these magnitudes.
    assert jnp.allclose(out, ref, atol=2e-2, rtol=2e-2), float(jnp.max(jnp.abs(out - ref)))

    print("KERNEL_OK")
</pallas_src>

<mosaic_0001>
module attributes {stable_mosaic.version = 11 : i64} {
  func.func @conv_bn_relu_pool_kernel(%arg0: i32, %arg1: memref<256x160xbf16, #tpu.memory_space<vmem>>, %arg2: memref<160x64xbf16, #tpu.memory_space<vmem>>, %arg3: memref<1x8x512xf32, #tpu.memory_space<vmem>>) attributes {dimension_semantics = [#tpu.dimension_semantics<parallel>], iteration_bounds = array<i64: 2>, scalar_prefetch = 0 : i64, scratch_operands = 0 : i64, tpu.core_type = #tpu.core_type<tc>, window_params = [{transform_indices = @transform_0, window_bounds = array<i64: 256, 160>}, {pipeline_mode = #tpu.pipeline_mode<synchronous>, transform_indices = @transform_1, window_bounds = array<i64: 160, 64>}, {transform_indices = @transform_2, window_bounds = array<i64: 1, 8, 512>}]} {
    %c0 = arith.constant 0 : index
    %c0_0 = arith.constant 0 : index
    %0 = vector.load %arg1[%c0, %c0_0] : memref<256x160xbf16, #tpu.memory_space<vmem>>, vector<256x160xbf16>
    %c0_1 = arith.constant 0 : index
    %c0_2 = arith.constant 0 : index
    %1 = vector.load %arg2[%c0_1, %c0_2] : memref<160x64xbf16, #tpu.memory_space<vmem>>, vector<160x64xbf16>
    %cst = arith.constant dense<0.000000e+00> : vector<256x64xf32>
    %2 = tpu.matmul %0, %1, %cst {dimension_numbers = #tpu.dot_dimension_numbers<[1], [0], [0], [1], [0, 0, 1, 1], [], []>} : vector<256x160xbf16>, vector<160x64xbf16>, vector<256x64xf32> -> vector<256x64xf32>
    %cst_3 = arith.constant 0.000000e+00 : f32
    %3 = vector.broadcast %cst_3 : f32 to vector<256x64xf32>
    %4 = arith.maximumf %2, %3 : vector<256x64xf32>
    %5 = vector.shape_cast %4 : vector<256x64xf32> to vector<1x16x16x64xf32>
    %cst_4 = arith.constant 0.000000e+00 : f32
    %6 = vector.broadcast %cst_4 : f32 to vector<1x1x16x64xf32>
    %7 = tpu.concatenate %6, %5, %6 in 1 : vector<1x1x16x64xf32>, vector<1x16x16x64xf32>, vector<1x1x16x64xf32> -> vector<1x18x16x64xf32>
    %8 = vector.shape_cast %7 : vector<1x18x16x64xf32> to vector<1x9x2x16x64xf32>
    %9 = vector.extract_strided_slice %8 {offsets = [0, 0, 0, 0, 0], sizes = [1, 9, 1, 16, 64], strides = [1, 1, 1, 1, 1]} : vector<1x9x2x16x64xf32> to vector<1x9x1x16x64xf32>
    %10 = vector.shape_cast %9 : vector<1x9x1x16x64xf32> to vector<1x9x16x64xf32>
    %11 = vector.extract_strided_slice %8 {offsets = [0, 0, 1, 0, 0], sizes = [1, 9, 1, 16, 64], strides = [1, 1, 1, 1, 1]} : vector<1x9x2x16x64xf32> to vector<1x9x1x16x64xf32>
    %12 = vector.shape_cast %11 : vector<1x9x1x16x64xf32> to vector<1x9x16x64xf32>
    %13 = arith.maximumf %10, %12 : vector<1x9x16x64xf32>
    %14 = vector.extract_strided_slice %13 {offsets = [0, 0, 0, 0], sizes = [1, 8, 16, 64], strides = [1, 1, 1, 1]} : vector<1x9x16x64xf32> to vector<1x8x16x64xf32>
    %15 = vector.extract_strided_slice %8 {offsets = [0, 1, 0, 0, 0], sizes = [1, 8, 1, 16, 64], strides = [1, 1, 1, 1, 1]} : vector<1x9x2x16x64xf32> to vector<1x8x1x16x64xf32>
    %16 = vector.shape_cast %15 : vector<1x8x1x16x64xf32> to vector<1x8x16x64xf32>
    %17 = arith.maximumf %14, %16 : vector<1x8x16x64xf32>
    %18 = vector.extract_strided_slice %17 {offsets = [0, 0, 0, 0], sizes = [1, 8, 15, 64], strides = [1, 1, 1, 1]} : vector<1x8x16x64xf32> to vector<1x8x15x64xf32>
    %19 = vector.extract_strided_slice %17 {offsets = [0, 0, 1, 0], sizes = [1, 8, 15, 64], strides = [1, 1, 1, 1]} : vector<1x8x16x64xf32> to vector<1x8x15x64xf32>
    %20 = arith.maximumf %18, %19 : vector<1x8x15x64xf32>
    %21 = vector.extract_strided_slice %20 {offsets = [0, 0, 0, 0], sizes = [1, 8, 14, 64], strides = [1, 1, 1, 1]} : vector<1x8x15x64xf32> to vector<1x8x14x64xf32>
    %22 = vector.extract_strided_slice %17 {offsets = [0, 0, 2, 0], sizes = [1, 8, 14, 64], strides = [1, 1, 1, 1]} : vector<1x8x16x64xf32> to vector<1x8x14x64xf32>
    %23 = arith.maximumf %21, %22 : vector<1x8x14x64xf32>
    %24 = vector.extract_strided_slice %20 {offsets = [0, 0, 0, 0], sizes = [1, 8, 1, 64], strides = [1, 1, 1, 1]} : vector<1x8x15x64xf32> to vector<1x8x1x64xf32>
    %25 = vector.shape_cast %24 : vector<1x8x1x64xf32> to vector<1x8x64xf32>
    %26 = vector.extract_strided_slice %23 {offsets = [0, 0, 1, 0], sizes = [1, 8, 1, 64], strides = [1, 1, 1, 1]} : vector<1x8x14x64xf32> to vector<1x8x1x64xf32>
    %27 = vector.shape_cast %26 : vector<1x8x1x64xf32> to vector<1x8x64xf32>
    %28 = vector.extract_strided_slice %23 {offsets = [0, 0, 3, 0], sizes = [1, 8, 1, 64], strides = [1, 1, 1, 1]} : vector<1x8x14x64xf32> to vector<1x8x1x64xf32>
    %29 = vector.shape_cast %28 : vector<1x8x1x64xf32> to vector<1x8x64xf32>
    %30 = vector.extract_strided_slice %23 {offsets = [0, 0, 5, 0], sizes = [1, 8, 1, 64], strides = [1, 1, 1, 1]} : vector<1x8x14x64xf32> to vector<1x8x1x64xf32>
    %31 = vector.shape_cast %30 : vector<1x8x1x64xf32> to vector<1x8x64xf32>
    %32 = vector.extract_strided_slice %23 {offsets = [0, 0, 7, 0], sizes = [1, 8, 1, 64], strides = [1, 1, 1, 1]} : vector<1x8x14x64xf32> to vector<1x8x1x64xf32>
    %33 = vector.shape_cast %32 : vector<1x8x1x64xf32> to vector<1x8x64xf32>
    %34 = vector.extract_strided_slice %23 {offsets = [0, 0, 9, 0], sizes = [1, 8, 1, 64], strides = [1, 1, 1, 1]} : vector<1x8x14x64xf32> to vector<1x8x1x64xf32>
    %35 = vector.shape_cast %34 : vector<1x8x1x64xf32> to vector<1x8x64xf32>
    %36 = vector.extract_strided_slice %23 {offsets = [0, 0, 11, 0], sizes = [1, 8, 1, 64], strides = [1, 1, 1, 1]} : vector<1x8x14x64xf32> to vector<1x8x1x64xf32>
    %37 = vector.shape_cast %36 : vector<1x8x1x64xf32> to vector<1x8x64xf32>
    %38 = vector.extract_strided_slice %23 {offsets = [0, 0, 13, 0], sizes = [1, 8, 1, 64], strides = [1, 1, 1, 1]} : vector<1x8x14x64xf32> to vector<1x8x1x64xf32>
    %39 = vector.shape_cast %38 : vector<1x8x1x64xf32> to vector<1x8x64xf32>
    %40 = tpu.concatenate %25, %27, %29, %31, %33, %35, %37, %39 in 2 : vector<1x8x64xf32>, vector<1x8x64xf32>, vector<1x8x64xf32>, vector<1x8x64xf32>, vector<1x8x64xf32>, vector<1x8x64xf32>, vector<1x8x64xf32>, vector<1x8x64xf32> -> vector<1x8x512xf32>
    %c0_5 = arith.constant 0 : index
    %c0_6 = arith.constant 0 : index
    %c0_7 = arith.constant 0 : index
    %41 = vector.load %arg3[%c0_5, %c0_6, %c0_7] : memref<1x8x512xf32, #tpu.memory_space<vmem>>, vector<1x8x512xf32>
    tpu.vector_store %arg3[%c0_5, %c0_6, %c0_7], %40 {strides = array<i32>} : memref<1x8x512xf32, #tpu.memory_space<vmem>>, vector<1x8x512xf32>,
    return
  }
  func.func @transform_0(%arg0: i32) -> (i32, i32) {
    %c0_i32 = arith.constant 0 : i32
    %c0_i32_0 = arith.constant 0 : i32
    return %arg0, %c0_i32 : i32, i32
  }
  func.func @transform_1(%arg0: i32) -> (i32, i32) {
    %c0_i32 = arith.constant 0 : i32
    %c0_i32_0 = arith.constant 0 : i32
    %c0_i32_1 = arith.constant 0 : i32
    return %c0_i32, %c0_i32_0 : i32, i32
  }
  func.func @transform_2(%arg0: i32) -> (i32, i32, i32) {
    %c0_i32 = arith.constant 0 : i32
    %c0_i32_0 = arith.constant 0 : i32
    %c0_i32_1 = arith.constant 0 : i32
    return %arg0, %c0_i32, %c0_i32_0 : i32, i32, i32
  }
}

</mosaic_0001>

<llo_original>
// kernel: new_model_forward.1
$region0: #{new_model_forward.1}
  #allocation0 [shape = 'u32[]', space=smem, size = 0x4, offset = 0x4, fixed_abs, tag = 'smem constant byte address 0x4 - core index']
  #allocation1 [shape = 'u32[144,128]{1,0:T(1,128)}', space=vmem, size = 0x12000, scoped, tag = 'internal scratch']
  %s0 = inlined_call_operand.vmem [shape: bf16[512,160], index: 0, kind: input, shape index: {}]
  %s1 = inlined_call_operand.vmem [shape: bf16[160,64], index: 1, kind: input, shape index: {}]
  %s2 = inlined_call_operand.vmem [shape: f32[2,8,512], index: 2, kind: output, shape index: {}]
  %s3 = sld [smem:[#allocation0]]
  $region41: #{new_model_forward.1} parent=0
    _
  %s5 = ssub.s32 1, %s3
  %s6 = scalar_select 0, %s5, %s3
  loop: start=0, step=1, limit=4
  $region2: #{new_model_forward.1} parent=0 // loop_pre_header
    _
  $region3: #{new_model_forward.1} parent=0 // loop_header
    %s8 = sphi 0, %s12
    %p9 = scmp.ge.s32.totalorder %s8, 4
    %s18 = sphi 0, %s20
    %s21 = sphi 0, %s18
    %s22 = sphi 0, %s21
    %s38 = sphi 0, %s22
    %s42 = sphi 0, %s42
    %s44 = sphi 0, %s42
    %s45 = sphi 0, %s44
    %s59 = sphi 0, %s45
    %s65 = sphi 0, %s67
    %s68 = sphi 0, %s65
    %s69 = sphi 0, %s68
    %s85 = sphi 0, %s69
  $region4: #{new_model_forward.1} parent=0 // loop_header_branch
    %11 = sbr.rel (%p9) target = $region8
  $region5: #{new_model_forward.1} parent=0 // loop_body
    %s13 = ssub.s32 %s8, 1
    %s14 = ssub.s32 %s8, 2
    %s15 = sadd.s32 %s8, 1
    %s16 = ssub.s32 %s8, %s15
    %p17 = scmp.eq.s32.totalorder %s16, 0
    %s19 = sadd.s32 %s18, 1
    %s20 = scalar_select %p17, %s18, %s19
    %p23 = pneg %p17
    %p24 = scmp.eq.s32.totalorder %s8, 1
    %p25 = por %p23, %p24
    %p26 = scmp.ne.s32.totalorder %s18, %s21
    %p27 = scmp.eq.s32.totalorder %s8, 0
    %p28 = por %p26, %p27
    %p29 = scmp.ne.s32.totalorder %s18, %s21
    %p30 = scmp.eq.s32.totalorder %s13, 1
    %p31 = por %p29, %p30
    %p32 = scmp.ne.s32.totalorder %s21, %s22
    %p33 = scmp.eq.s32.totalorder %s13, 0
    %p34 = por %p32, %p33
    %p35 = scmp.ne.s32.totalorder %s21, %s22
    %p36 = scmp.eq.s32.totalorder %s14, 1
    %p37 = por %p35, %p36
    %p39 = scmp.ne.s32.totalorder %s22, %s38
    %p40 = scmp.eq.s32.totalorder %s14, 0
    %p41 = por %p39, %p40
    %s43 = sadd.s32 %s42, 1
    %p46 = scmp.eq.s32.totalorder %s8, 1
    %p47 = scmp.ne.s32.totalorder %s42, %s44
    %p48 = scmp.eq.s32.totalorder %s8, 0
    %p49 = por %p47, %p48
    %p50 = scmp.ne.s32.totalorder %s42, %s44
    %p51 = scmp.eq.s32.totalorder %s13, 1
    %p52 = por %p50, %p51
    %p53 = scmp.ne.s32.totalorder %s44, %s45
    %p54 = scmp.eq.s32.totalorder %s13, 0
    %p55 = por %p53, %p54
    %p56 = scmp.ne.s32.totalorder %s44, %s45
    %p57 = scmp.eq.s32.totalorder %s14, 1
    %p58 = por %p56, %p57
    %p60 = scmp.ne.s32.totalorder %s45, %s59
    %p61 = scmp.eq.s32.totalorder %s14, 0
    %p62 = por %p60, %p61
    %s63 = ssub.s32 %s8, %s15
    %p64 = scmp.eq.s32.totalorder %s63, 0
    %s66 = sadd.s32 %s65, 1
    %s67 = scalar_select %p64, %s65, %s66
    %p70 = pneg %p64
    %p71 = scmp.eq.s32.totalorder %s8, 1
    %p72 = por %p70, %p71
    %p73 = scmp.ne.s32.totalorder %s65, %s68
    %p74 = scmp.eq.s32.totalorder %s8, 0
    %p75 = por %p73, %p74
    %p76 = scmp.ne.s32.totalorder %s65, %s68
    %p77 = scmp.eq.s32.totalorder %s13, 1
    %p78 = por %p76, %p77
    %p79 = scmp.ne.s32.totalorder %s68, %s69
    %p80 = scmp.eq.s32.totalorder %s13, 0
    %p81 = por %p79, %p80
    %p82 = scmp.ne.s32.totalorder %s68, %s69
    %p83 = scmp.eq.s32.totalorder %s14, 1
    %p84 = por %p82, %p83
    %p86 = scmp.ne.s32.totalorder %s69, %s85
    %p87 = scmp.eq.s32.totalorder %s14, 0
    %p88 = por %p86, %p87
    %p89 = scmp.le.s32.totalorder 1, %s8
    %p90 = scmp.lt.s32.totalorder %s8, 3
    %p91 = pnand %p89, %p90
    %p92 = pneg %p91
    // Predicated region
    $region9: #{new_model_forward.1} parent=5 // pred_check
      _
    $region10: #{new_model_forward.1} parent=5 // pred_check_branch
      %94 = sbr.rel (%p91) target = $region12
    $region11: #{new_model_forward.1} parent=5 // pred_region
      %s95 = ssub.s32 %s8, 1
      // Predicated region
      $region13: #{new_model_forward.1} parent=11 // pred_check
        %p96 = pneg %p55
      $region14: #{new_model_forward.1} parent=11 // pred_check_branch
        %98 = sbr.rel (%p96) target = $region16
      $region15: #{new_model_forward.1} parent=11 // pred_region
        _
      $region16: #{new_model_forward.1} parent=11 // pred_fallthru
        _
    $region12: #{new_model_forward.1} parent=5 // pred_fallthru
      _
    %p99 = scmp.lt.s32.totalorder %s8, 2
    // Predicated region
    $region17: #{new_model_forward.1} parent=5 // pred_check
      %p100 = pneg %p99
    $region18: #{new_model_forward.1} parent=5 // pred_check_branch
      %102 = sbr.rel (%p100) target = $region20
    $region19: #{new_model_forward.1} parent=5 // pred_region
      // Predicated region
      $region21: #{new_model_forward.1} parent=19 // pred_check
        %p103 = pneg %p28
      $region22: #{new_model_forward.1} parent=19 // pred_check_branch
        %105 = sbr.rel (%p103) target = $region24
      $region23: #{new_model_forward.1} parent=19 // pred_region
        %s106 = smul.u32 32, %s8
        %p107 = scmp.lt.s32.totalorder %s106, 63
        %s108 = scalar_select %p107, %s106, 63
        %s109 = smul.addr %s108, 2
        %s110 = smul.addr %s109, 4
        %s111 = scalar_lea.vmem %s0, %s110
        %s112 = smul.u32 32, %s8
      $region24: #{new_model_forward.1} parent=19 // pred_fallthru
        _
    $region20: #{new_model_forward.1} parent=5 // pred_fallthru
      _
    %p113 = scmp.le.s32.totalorder 1, %s8
    %p114 = scmp.lt.s32.totalorder %s8, 3
    %p115 = pnand %p113, %p114
    %p116 = pneg %p115
    // Predicated region
    $region25: #{new_model_forward.1} parent=5 // pred_check
      _
    $region26: #{new_model_forward.1} parent=5 // pred_check_branch
      %118 = sbr.rel (%p115) target = $region28
    $region27: #{new_model_forward.1} parent=5 // pred_region
      %s119 = ssub.s32 %s8, 1
      %s120 = smul.u32 32, %s13
      %p121 = scmp.lt.s32.totalorder %s120, 63
      %s122 = scalar_select %p121, %s120, 63
      %s123 = smul.addr %s122, 2
      %s124 = smul.addr %s123, 4
      %s125 = scalar_lea.vmem %s0, %s124
      %p126 = pneg %p34
      %p127 = pneg %p31
      %p128 = pneg %p55
      %p129 = pneg %p52
      %p130 = pneg %p81
      %p131 = pneg %p78
      %p132 = scmp.lt.s32.totalorder %s13, 1
      %s133 = scalar_select %p132, %s13, 1
      %s134 = smul.addr %s133, 4
      %s135 = smul.addr %s134, 8
      %s136 = scalar_lea.vmem %s2, %s135
      %s137 = smul.u32 32, %s13
      %p138 = scmp.lt.s32.totalorder %s137, 63
      %s139 = scalar_select %p138, %s137, 63
      %s140 = smul.addr %s139, 2
      %s141 = smul.addr %s140, 4
      %s142 = scalar_lea.vmem %s0, %s141
      %s143 = smul.u32 32, %s13
      %p144 = scmp.lt.s32.totalorder %s13, 1
      %s145 = scalar_select %p144, %s13, 1
      %s146 = smul.addr %s145, 4
      %s147 = smul.addr %s146, 8
      %s148 = scalar_lea.vmem %s2, %s147
      %v150 = vld [vmem:[%s142] sm:$0xff]
      %v151 = vld [vmem:[%s142 + $0x8] sm:$0xff]
      %v152 = vld [vmem:[%s142 + $0x10] sm:$0xff]
      %v153 = vld [vmem:[%s142 + $0x18] sm:$0xff]
      %v154 = vld [vmem:[%s142 + $0x20] sm:$0xff]
      %v155 = vld [vmem:[%s142 + $0x28] sm:$0xff]
      %v156 = vld [vmem:[%s142 + $0x30] sm:$0xff]
      %v157 = vld [vmem:[%s142 + $0x38] sm:$0xff]
      %v158 = vld [vmem:[%s142 + $0x40] sm:$0xff]
      %v159 = vld [vmem:[%s142 + $0x48] sm:$0xff]
      %v160 = vld [vmem:[%s142 + $0x50] sm:$0xff]
      %v161 = vld [vmem:[%s142 + $0x58] sm:$0xff]
      %v162 = vld [vmem:[%s142 + $0x60] sm:$0xff]
      %v163 = vld [vmem:[%s142 + $0x68] sm:$0xff]
      %v164 = vld [vmem:[%s142 + $0x70] sm:$0xff]
      %v165 = vld [vmem:[%s142 + $0x78] sm:$0xff]
      %v166 = vld [vmem:[%s142 + $0x80] sm:$0xff]
      %v167 = vld [vmem:[%s142 + $0x88] sm:$0xff]
      %v168 = vld [vmem:[%s142 + $0x90] sm:$0xff]
      %v169 = vld [vmem:[%s142 + $0x98] sm:$0xff]
      %v170 = vld [vmem:[%s142 + $0xa0] sm:$0xff]
      %v171 = vld [vmem:[%s142 + $0xa8] sm:$0xff]
      %v172 = vld [vmem:[%s142 + $0xb0] sm:$0xff]
      %v173 = vld [vmem:[%s142 + $0xb8] sm:$0xff]
      %v174 = vld [vmem:[%s142 + $0xc0] sm:$0xff]
      %v175 = vld [vmem:[%s142 + $0xc8] sm:$0xff]
      %v176 = vld [vmem:[%s142 + $0xd0] sm:$0xff]
      %v177 = vld [vmem:[%s142 + $0xd8] sm:$0xff]
      %v178 = vld [vmem:[%s142 + $0xe0] sm:$0xff]
      %v179 = vld [vmem:[%s142 + $0xe8] sm:$0xff]
      %v180 = vld [vmem:[%s142 + $0xf0] sm:$0xff]
      %v181 = vld [vmem:[%s142 + $0xf8] sm:$0xff]
      %v182 = vld [vmem:[%s1] sm:$0xf]
      %v183 = vld [vmem:[%s1 + $0x4] sm:$0xf]
      %v184 = vld [vmem:[%s1 + $0x8] sm:$0xf]
      %v185 = vld [vmem:[%s1 + $0xc] sm:$0xf]
      %v186 = vld [vmem:[%s1 + $0x10] sm:$0xf]
      %v187 = vld [vmem:[%s1 + $0x14] sm:$0xf]
      %v188 = vld [vmem:[%s1 + $0x18] sm:$0xf]
      %v189 = vld [vmem:[%s1 + $0x1c] sm:$0xf]
      %v190 = vld [vmem:[%s1 + $0x20] sm:$0xf]
      %v191 = vld [vmem:[%s1 + $0x24] sm:$0xf]
      %v192 = vld [vmem:[%s1 + $0x28] sm:$0xf]
      %v193 = vld [vmem:[%s1 + $0x2c] sm:$0xf]
      %v194 = vld [vmem:[%s1 + $0x30] sm:$0xf]
      %v195 = vld [vmem:[%s1 + $0x34] sm:$0xf]
      %v196 = vld [vmem:[%s1 + $0x38] sm:$0xf]
      %v197 = vld [vmem:[%s1 + $0x3c] sm:$0xf]
      %v198 = vld [vmem:[%s1 + $0x40] sm:$0xf]
      %v199 = vld [vmem:[%s1 + $0x44] sm:$0xf]
      %v200 = vld [vmem:[%s1 + $0x48] sm:$0xf]
      %v201 = vld [vmem:[%s1 + $0x4c] sm:$0xf]
      %v234 = vunpack.c.l.b16 %v150
      %v235 = vunpack.c.h.b16 %v150
      %v236 = vunpack.c.l.b16 %v151
      %v237 = vunpack.c.h.b16 %v151
      %v238 = vunpack.c.l.b16 %v152
      %v239 = vunpack.c.h.b16 %v152
      %v240 = vunpack.c.l.b16 %v153
      %v241 = vunpack.c.h.b16 %v153
      %v242 = vunpack.c.l.b16 %v154
      %v243 = vunpack.c.h.b16 %v154
      %v244 = vunpack.c.l.b16 %v155
      %v245 = vunpack.c.h.b16 %v155
      %v246 = vunpack.c.l.b16 %v156
      %v247 = vunpack.c.h.b16 %v156
      %v248 = vunpack.c.l.b16 %v157
      %v249 = vunpack.c.h.b16 %v157
      %v250 = vunpack.c.l.b16 %v158
      %v251 = vunpack.c.h.b16 %v158
      %v252 = vunpack.c.l.b16 %v159
      %v253 = vunpack.c.h.b16 %v159
      %v254 = vunpack.c.l.b16 %v160
      %v255 = vunpack.c.h.b16 %v160
      %v256 = vunpack.c.l.b16 %v161
      %v257 = vunpack.c.h.b16 %v161
      %v258 = vunpack.c.l.b16 %v162
      %v259 = vunpack.c.h.b16 %v162
      %v260 = vunpack.c.l.b16 %v163
      %v261 = vunpack.c.h.b16 %v163
      %v262 = vunpack.c.l.b16 %v164
      %v263 = vunpack.c.h.b16 %v164
      %v264 = vunpack.c.l.b16 %v165
      %v265 = vunpack.c.h.b16 %v165
      %v266 = vunpack.c.l.b16 %v166
      %v267 = vunpack.c.h.b16 %v166
      %v268 = vunpack.c.l.b16 %v167
      %v269 = vunpack.c.h.b16 %v167
      %v270 = vunpack.c.l.b16 %v168
      %v271 = vunpack.c.h.b16 %v168
      %v272 = vunpack.c.l.b16 %v169
      %v273 = vunpack.c.h.b16 %v169
      %v274 = vunpack.c.l.b16 %v170
      %v275 = vunpack.c.h.b16 %v170
      %v276 = vunpack.c.l.b16 %v171
      %v277 = vunpack.c.h.b16 %v171
      %v278 = vunpack.c.l.b16 %v172
      %v279 = vunpack.c.h.b16 %v172
      %v280 = vunpack.c.l.b16 %v173
      %v281 = vunpack.c.h.b16 %v173
      %v282 = vunpack.c.l.b16 %v174
      %v283 = vunpack.c.h.b16 %v174
      %v284 = vunpack.c.l.b16 %v175
      %v285 = vunpack.c.h.b16 %v175
      %v286 = vunpack.c.l.b16 %v176
      %v287 = vunpack.c.h.b16 %v176
      %v288 = vunpack.c.l.b16 %v177
      %v289 = vunpack.c.h.b16 %v177
      %v290 = vunpack.c.l.b16 %v178
      %v291 = vunpack.c.h.b16 %v178
      %v292 = vunpack.c.l.b16 %v179
      %v293 = vunpack.c.h.b16 %v179
      %v294 = vunpack.c.l.b16 %v180
      %v295 = vunpack.c.h.b16 %v180
      %v296 = vunpack.c.l.b16 %v181
      %v297 = vunpack.c.h.b16 %v181
      %v298 = vpack.c.b16 %v236, %v234
      %v299 = vpack.c.b16 %v237, %v235
      %v300 = vpack.c.b16 %v240, %v238
      %v301 = vpack.c.b16 %v241, %v239
      %v302 = vpack.c.b16 %v244, %v242
      %v303 = vpack.c.b16 %v245, %v243
      %v304 = vpack.c.b16 %v248, %v246
      %v305 = vpack.c.b16 %v249, %v247
      %v306 = vpack.c.b16 %v252, %v250
      %v307 = vpack.c.b16 %v253, %v251
      %v308 = vpack.c.b16 %v256, %v254
      %v309 = vpack.c.b16 %v257, %v255
      %v310 = vpack.c.b16 %v260, %v258
      %v311 = vpack.c.b16 %v261, %v259
      %v312 = vpack.c.b16 %v264, %v262
      %v313 = vpack.c.b16 %v265, %v263
      %v314 = vpack.c.b16 %v268, %v266
      %v315 = vpack.c.b16 %v269, %v267
      %v316 = vpack.c.b16 %v272, %v270
      %v317 = vpack.c.b16 %v273, %v271
      %v318 = vpack.c.b16 %v276, %v274
      %v319 = vpack.c.b16 %v277, %v275
      %v320 = vpack.c.b16 %v280, %v278
      %v321 = vpack.c.b16 %v281, %v279
      %v322 = vpack.c.b16 %v284, %v282
      %v323 = vpack.c.b16 %v285, %v283
      %v324 = vpack.c.b16 %v288, %v286
      %v325 = vpack.c.b16 %v289, %v287
      %v326 = vpack.c.b16 %v292, %v290
      %v327 = vpack.c.b16 %v293, %v291
      %v328 = vpack.c.b16 %v296, %v294
      %v329 = vpack.c.b16 %v297, %v295
      %v366 = vunpack.c.l.b16 %v182
      %v367 = vunpack.c.l.b16 %v183
      %v368 = vunpack.c.l.b16 %v184
      %v369 = vunpack.c.l.b16 %v185
      %v370 = vunpack.c.l.b16 %v186
      %v371 = vunpack.c.l.b16 %v187
      %v372 = vunpack.c.l.b16 %v188
      %v373 = vunpack.c.l.b16 %v189
      %v374 = vunpack.c.l.b16 %v190
      %v375 = vunpack.c.l.b16 %v191
      %v376 = vunpack.c.l.b16 %v192
      %v377 = vunpack.c.l.b16 %v193
      %v378 = vunpack.c.l.b16 %v194
      %v379 = vunpack.c.l.b16 %v195
      %v380 = vunpack.c.l.b16 %v196
      %v381 = vunpack.c.l.b16 %v197
      %v382 = vunpack.c.l.b16 %v198
      %v383 = vunpack.c.l.b16 %v199
      %v384 = vunpack.c.l.b16 %v200
      %v385 = vunpack.c.l.b16 %v201
      %v386 = vpack.c.b16 %v367, %v366
      %v387 = vpack.c.b16 %v369, %v368
      %v388 = vpack.c.b16 %v371, %v370
      %v389 = vpack.c.b16 %v373, %v372
      %v390 = vpack.c.b16 %v375, %v374
      %v391 = vpack.c.b16 %v377, %v376
      %v392 = vpack.c.b16 %v379, %v378
      %v393 = vpack.c.b16 %v381, %v380
      %v394 = vpack.c.b16 %v383, %v382
      %v395 = vpack.c.b16 %v385, %v384
      %vm406 = vcmask 261120
      %v408 = vsel %vm406, %v299, 0
      %v411 = vsel %vm406, %v301, 0
      %v414 = vsel %vm406, %v303, 0
      %v417 = vsel %vm406, %v305, 0
      %v420 = vsel %vm406, %v307, 0
      %v423 = vsel %vm406, %v309, 0
      %v426 = vsel %vm406, %v311, 0
      %v429 = vsel %vm406, %v313, 0
      %v432 = vsel %vm406, %v315, 0
      %v435 = vsel %vm406, %v317, 0
      %v438 = vsel %vm406, %v319, 0
      %v441 = vsel %vm406, %v321, 0
      %v444 = vsel %vm406, %v323, 0
      %v447 = vsel %vm406, %v325, 0
      %v450 = vsel %vm406, %v327, 0
      %v453 = vsel %vm406, %v329, 0
      %455 = vmatprep.subr.bf16.mxu0 0
      %456 = vmatpush1.bf16.msra.mxu0 %v393
      %457 = vmatprep.subr.bf16.mxu0 0
      %458 = vmatpush1.bf16.msra.mxu0 %v392
      %459 = vmatprep.subr.bf16.mxu0 0
      %460 = vmatpush1.bf16.msra.mxu0 %v391
      %461 = vmatprep.subr.bf16.mxu0 0
      %462 = vmatpush1.bf16.msra.mxu0 %v390
      %463 = vmatprep.subr.bf16.mxu0 0
      %464 = vmatpush1.bf16.msra.mxu0 %v389
      %465 = vmatprep.subr.bf16.mxu0 0
      %466 = vmatpush1.bf16.msra.mxu0 %v388
      %467 = vmatprep.subr.bf16.mxu0 0
      %468 = vmatpush1.bf16.msra.mxu0 %v387
      %469 = vmatprep.subr.bf16.mxu0 0
      %470 = vmatpush1.bf16.msra.mxu0 %v386
      %471 = vmatprep.subr.bf16.mxu0 0
      %472 = vmatpush2.bf16.msra.mxu0 0
      %473 = vmatprep.subr.bf16.mxu0 0
      %474 = vmatpush2.bf16.msra.mxu0 0
      %475 = vmatprep.subr.bf16.mxu0 0
      %476 = vmatpush2.bf16.msra.mxu0 0
      %477 = vmatprep.subr.bf16.mxu0 0
      %478 = vmatpush2.bf16.msra.mxu0 0
      %479 = vmatprep.subr.bf16.mxu0 0
      %480 = vmatpush2.bf16.msra.mxu0 0
      %481 = vmatprep.subr.bf16.mxu0 0
      %482 = vmatpush2.bf16.msra.mxu0 0
      %483 = vmatprep.subr.bf16.mxu0 0
      %484 = vmatpush2.bf16.msra.mxu0 %v395
      %485 = vmatprep.subr.bf16.mxu0 0
      %486 = vmatpush2.bf16.msra.mxu0 %v394
      %487 = vmatprep.mubr.bf16.mxu0 %v408
      %488 = vmatmul.mubr.bf16.gmra.mxu0 %v298
      %v489 = vpop.f32.mrf.mxu0
      %v490 = vadd.f32 0.0, %v489
      %v491 = vpop.f32.mrf.mxu0
      %v492 = vpop.f32.mrf.mxu0
      %v493 = vadd.f32 0.0, %v492
      %v494 = vpop.f32.mrf.mxu0
      %495 = vmatprep.mubr.bf16.mxu0 %v411
      %496 = vmatmul.mubr.bf16.gmra.mxu0 %v300
      %v497 = vpop.f32.mrf.mxu0
      %v498 = vadd.f32 0.0, %v497
      %v499 = vpop.f32.mrf.mxu0
      %v500 = vpop.f32.mrf.mxu0
      %v501 = vadd.f32 0.0, %v500
      %v502 = vpop.f32.mrf.mxu0
      %503 = vmatprep.mubr.bf16.mxu0 %v414
      %504 = vmatmul.mubr.bf16.gmra.mxu0 %v302
      %v505 = vpop.f32.mrf.mxu0
      %v506 = vadd.f32 0.0, %v505
      %v507 = vpop.f32.mrf.mxu0
      %v508 = vpop.f32.mrf.mxu0
      %v509 = vadd.f32 0.0, %v508
      %v510 = vpop.f32.mrf.mxu0
      %511 = vmatprep.mubr.bf16.mxu0 %v417
      %512 = vmatmul.mubr.bf16.gmra.mxu0 %v304
      %v513 = vpop.f32.mrf.mxu0
      %v514 = vadd.f32 0.0, %v513
      %v515 = vpop.f32.mrf.mxu0
      %v516 = vpop.f32.mrf.mxu0
      %v517 = vadd.f32 0.0, %v516
      %v518 = vpop.f32.mrf.mxu0
      %519 = vmatprep.mubr.bf16.mxu0 %v420
      %520 = vmatmul.mubr.bf16.gmra.mxu0 %v306
      %v521 = vpop.f32.mrf.mxu0
      %v522 = vadd.f32 0.0, %v521
      %v523 = vpop.f32.mrf.mxu0
      %v524 = vpop.f32.mrf.mxu0
      %v525 = vadd.f32 0.0, %v524
      %v526 = vpop.f32.mrf.mxu0
      %527 = vmatprep.mubr.bf16.mxu0 %v423
      %528 = vmatmul.mubr.bf16.gmra.mxu0 %v308
      %v529 = vpop.f32.mrf.mxu0
      %v530 = vadd.f32 0.0, %v529
      %v531 = vpop.f32.mrf.mxu0
      %v532 = vpop.f32.mrf.mxu0
      %v533 = vadd.f32 0.0, %v532
      %v534 = vpop.f32.mrf.mxu0
      %535 = vmatprep.mubr.bf16.mxu0 %v426
      %536 = vmatmul.mubr.bf16.gmra.mxu0 %v310
      %v537 = vpop.f32.mrf.mxu0
      %v538 = vadd.f32 0.0, %v537
      %v539 = vpop.f32.mrf.mxu0
      %v540 = vpop.f32.mrf.mxu0
      %v541 = vadd.f32 0.0, %v540
      %v542 = vpop.f32.mrf.mxu0
      %543 = vmatprep.mubr.bf16.mxu0 %v429
      %544 = vmatmul.mubr.bf16.gmra.mxu0 %v312
      %v545 = vpop.f32.mrf.mxu0
      %v546 = vadd.f32 0.0, %v545
      %v547 = vpop.f32.mrf.mxu0
      %v548 = vpop.f32.mrf.mxu0
      %v549 = vadd.f32 0.0, %v548
      %v550 = vpop.f32.mrf.mxu0
      %551 = vmatprep.mubr.bf16.mxu0 %v432
      %552 = vmatmul.mubr.bf16.gmra.mxu0 %v314
      %v553 = vpop.f32.mrf.mxu0
      %v554 = vadd.f32 0.0, %v553
      %v555 = vpop.f32.mrf.mxu0
      %v556 = vpop.f32.mrf.mxu0
      %v557 = vadd.f32 0.0, %v556
      %v558 = vpop.f32.mrf.mxu0
      %559 = vmatprep.mubr.bf16.mxu0 %v435
      %560 = vmatmul.mubr.bf16.gmra.mxu0 %v316
      %v561 = vpop.f32.mrf.mxu0
      %v562 = vadd.f32 0.0, %v561
      %v563 = vpop.f32.mrf.mxu0
      %v564 = vpop.f32.mrf.mxu0
      %v565 = vadd.f32 0.0, %v564
      %v566 = vpop.f32.mrf.mxu0
      %567 = vmatprep.mubr.bf16.mxu0 %v438
      %568 = vmatmul.mubr.bf16.gmra.mxu0 %v318
      %v569 = vpop.f32.mrf.mxu0
      %v570 = vadd.f32 0.0, %v569
      %v571 = vpop.f32.mrf.mxu0
      %v572 = vpop.f32.mrf.mxu0
      %v573 = vadd.f32 0.0, %v572
      %v574 = vpop.f32.mrf.mxu0
      %575 = vmatprep.mubr.bf16.mxu0 %v441
      %576 = vmatmul.mubr.bf16.gmra.mxu0 %v320
      %v577 = vpop.f32.mrf.mxu0
      %v578 = vadd.f32 0.0, %v577
      %v579 = vpop.f32.mrf.mxu0
      %v580 = vpop.f32.mrf.mxu0
      %v581 = vadd.f32 0.0, %v580
      %v582 = vpop.f32.mrf.mxu0
      %583 = vmatprep.mubr.bf16.mxu0 %v444
      %584 = vmatmul.mubr.bf16.gmra.mxu0 %v322
      %v585 = vpop.f32.mrf.mxu0
      %v586 = vadd.f32 0.0, %v585
      %v587 = vpop.f32.mrf.mxu0
      %v588 = vpop.f32.mrf.mxu0
      %v589 = vadd.f32 0.0, %v588
      %v590 = vpop.f32.mrf.mxu0
      %591 = vmatprep.mubr.bf16.mxu0 %v447
      %592 = vmatmul.mubr.bf16.gmra.mxu0 %v324
      %v593 = vpop.f32.mrf.mxu0
      %v594 = vadd.f32 0.0, %v593
      %v595 = vpop.f32.mrf.mxu0
      %v596 = vpop.f32.mrf.mxu0
      %v597 = vadd.f32 0.0, %v596
      %v598 = vpop.f32.mrf.mxu0
      %599 = vmatprep.mubr.bf16.mxu0 %v450
      %600 = vmatmul.mubr.bf16.gmra.mxu0 %v326
      %v601 = vpop.f32.mrf.mxu0
      %v602 = vadd.f32 0.0, %v601
      %v603 = vpop.f32.mrf.mxu0
      %v604 = vpop.f32.mrf.mxu0
      %v605 = vadd.f32 0.0, %v604
      %v606 = vpop.f32.mrf.mxu0
      %607 = vmatprep.mubr.bf16.mxu0 %v453
      %608 = vmatmul.mubr.bf16.gmra.mxu0 %v328
      %v609 = vpop.f32.mrf.mxu0
      %v610 = vadd.f32 0.0, %v609
      %v611 = vpop.f32.mrf.mxu0
      %v612 = vpop.f32.mrf.mxu0
      %v613 = vadd.f32 0.0, %v612
      %v614 = vpop.f32.mrf.mxu0
      %615 = vdwg.mxu0
      %v616 = vmax.f32 %v490, 0.0
      %v617 = vmax.f32 %v493, 0.0
      %v618 = vmax.f32 %v498, 0.0
      %v619 = vmax.f32 %v501, 0.0
      %v620 = vmax.f32 %v506, 0.0
      %v621 = vmax.f32 %v509, 0.0
      %v622 = vmax.f32 %v514, 0.0
      %v623 = vmax.f32 %v517, 0.0
      %v624 = vmax.f32 %v522, 0.0
      %v625 = vmax.f32 %v525, 0.0
      %v626 = vmax.f32 %v530, 0.0
      %v627 = vmax.f32 %v533, 0.0
      %v628 = vmax.f32 %v538, 0.0
      %v629 = vmax.f32 %v541, 0.0
      %v630 = vmax.f32 %v546, 0.0
      %v631 = vmax.f32 %v549, 0.0
      %v632 = vmax.f32 %v554, 0.0
      %v633 = vmax.f32 %v557, 0.0
      %v634 = vmax.f32 %v562, 0.0
      %v635 = vmax.f32 %v565, 0.0
      %v636 = vmax.f32 %v570, 0.0
      %v637 = vmax.f32 %v573, 0.0
      %v638 = vmax.f32 %v578, 0.0
      %v639 = vmax.f32 %v581, 0.0
      %v640 = vmax.f32 %v586, 0.0
      %v641 = vmax.f32 %v589, 0.0
      %v642 = vmax.f32 %v594, 0.0
      %v643 = vmax.f32 %v597, 0.0
      %v644 = vmax.f32 %v602, 0.0
      %v645 = vmax.f32 %v605, 0.0
      %v646 = vmax.f32 %v610, 0.0
      %v647 = vmax.f32 %v613, 0.0
      %v648 = vmax.f32 %v616, 0.0
      %v649 = vmax.f32 %v617, 0.0
      %v650 = vmax.f32 %v618, %v620
      %v651 = vmax.f32 %v619, %v621
      %v652 = vmax.f32 %v622, %v624
      %v653 = vmax.f32 %v623, %v625
      %v654 = vmax.f32 %v626, %v628
      %v655 = vmax.f32 %v627, %v629
      %v656 = vmax.f32 %v630, %v632
      %v657 = vmax.f32 %v631, %v633
      %v658 = vmax.f32 %v634, %v636
      %v659 = vmax.f32 %v635, %v637
      %v660 = vmax.f32 %v638, %v640
      %v661 = vmax.f32 %v639, %v641
      %v662 = vmax.f32 %v642, %v644
      %v663 = vmax.f32 %v643, %v645
      %v664 = vmax.f32 %v648, %v618
      %v665 = vmax.f32 %v649, %v619
      %v666 = vmax.f32 %v650, %v622
      %v667 = vmax.f32 %v651, %v623
      %v668 = vmax.f32 %v652, %v626
      %v669 = vmax.f32 %v653, %v627
      %v670 = vmax.f32 %v654, %v630
      %v671 = vmax.f32 %v655, %v631
      %v672 = vmax.f32 %v656, %v634
      %v673 = vmax.f32 %v657, %v635
      %v674 = vmax.f32 %v658, %v638
      %v675 = vmax.f32 %v659, %v639
      %v676 = vmax.f32 %v660, %v642
      %v677 = vmax.f32 %v661, %v643
      %v678 = vmax.f32 %v662, %v646
      %v679 = vmax.f32 %v663, %v647
      %vm696 = vcmask 1046528
      %v697 = vrot.slane %v664, 1
      %v698 = vrot.slane %v665, 1
      %v699 = vsel %vm696, %v697, %v698
      %v700 = vrot.slane %v666, 1
      %v701 = vrot.slane %v667, 1
      %v702 = vsel %vm696, %v700, %v701
      %v703 = vrot.slane %v668, 1
      %v704 = vrot.slane %v669, 1
      %v705 = vsel %vm696, %v703, %v704
      %v706 = vrot.slane %v670, 1
      %v707 = vrot.slane %v671, 1
      %v708 = vsel %vm696, %v706, %v707
      %v709 = vrot.slane %v672, 1
      %v710 = vrot.slane %v673, 1
      %v711 = vsel %vm696, %v709, %v710
      %v712 = vrot.slane %v674, 1
      %v713 = vrot.slane %v675, 1
      %v714 = vsel %vm696, %v712, %v713
      %v715 = vrot.slane %v676, 1
      %v716 = vrot.slane %v677, 1
      %v717 = vsel %vm696, %v715, %v716
      %v718 = vrot.slane %v678, 1
      %v719 = vrot.slane %v679, 1
      %v720 = vsel %vm696, %v718, %v719
      %v737 = vmax.f32 %v664, %v699
      %v738 = vmax.f32 %v665, %v698
      %v739 = vmax.f32 %v666, %v702
      %v740 = vmax.f32 %v667, %v701
      %v741 = vmax.f32 %v668, %v705
      %v742 = vmax.f32 %v669, %v704
      %v743 = vmax.f32 %v670, %v708
      %v744 = vmax.f32 %v671, %v707
      %v745 = vmax.f32 %v672, %v711
      %v746 = vmax.f32 %v673, %v710
      %v747 = vmax.f32 %v674, %v714
      %v748 = vmax.f32 %v675, %v713
      %v749 = vmax.f32 %v676, %v717
      %v750 = vmax.f32 %v677, %v716
      %v751 = vmax.f32 %v678, %v720
      %v752 = vmax.f32 %v679, %v719
      %vm753 = vcmask 1045504
      %v754 = vrot.slane %v664, 2
      %v755 = vrot.slane %v665, 2
      %v756 = vsel %vm753, %v754, %v755
      %v757 = vrot.slane %v666, 2
      %v758 = vrot.slane %v667, 2
      %v759 = vsel %vm753, %v757, %v758
      %v760 = vrot.slane %v668, 2
      %v761 = vrot.slane %v669, 2
      %v762 = vsel %vm753, %v760, %v761
      %v763 = vrot.slane %v670, 2
      %v764 = vrot.slane %v671, 2
      %v765 = vsel %vm753, %v763, %v764
      %v766 = vrot.slane %v672, 2
      %v767 = vrot.slane %v673, 2
      %v768 = vsel %vm753, %v766, %v767
      %v769 = vrot.slane %v674, 2
      %v770 = vrot.slane %v675, 2
      %v771 = vsel %vm753, %v769, %v770
      %v772 = vrot.slane %v676, 2
      %v773 = vrot.slane %v677, 2
      %v774 = vsel %vm753, %v772, %v773
      %v775 = vrot.slane %v678, 2
      %v776 = vrot.slane %v679, 2
      %v777 = vsel %vm753, %v775, %v776
      %v794 = vmax.f32 %v737, %v756
      %v795 = vmax.f32 %v738, %v755
      %v796 = vmax.f32 %v739, %v759
      %v797 = vmax.f32 %v740, %v758
      %v798 = vmax.f32 %v741, %v762
      %v799 = vmax.f32 %v742, %v761
      %v800 = vmax.f32 %v743, %v765
      %v801 = vmax.f32 %v744, %v764
      %v802 = vmax.f32 %v745, %v768
      %v803 = vmax.f32 %v746, %v767
      %v804 = vmax.f32 %v747, %v771
      %v805 = vmax.f32 %v748, %v770
      %v806 = vmax.f32 %v749, %v774
      %v807 = vmax.f32 %v750, %v773
      %v808 = vmax.f32 %v751, %v777
      %v809 = vmax.f32 %v752, %v776
      %v818 = vrot.slane %v739, 7
      %vm819 = vcmask 1041409
      %v820 = vsel %vm819, %v818, %v737
      %v821 = vrot.slane %v741, 6
      %vm822 = vcmask 1042434
      %v823 = vsel %vm822, %v821, %v820
      %v824 = vrot.slane %v743, 5
      %vm825 = vcmask 1043459
      %v826 = vsel %vm825, %v824, %v823
      %v827 = vrot.slane %v745, 4
      %vm828 = vcmask 1044484
      %v829 = vsel %vm828, %v827, %v826
      %v830 = vrot.slane %v747, 3
      %vm831 = vcmask 1045509
      %v832 = vsel %vm831, %v830, %v829
      %v833 = vrot.slane %v749, 2
      %vm834 = vcmask 1046534
      %v835 = vsel %vm834, %v833, %v832
      %v836 = vrot.slane %v751, 1
      %vm837 = vcmask 1047559
      %v838 = vsel %vm837, %v836, %v835
      %v848 = vrot.slane %v794, 1
      %v849 = vsel %vm819, %v796, %v848
      %v850 = vrot.slane %v798, 7
      %v851 = vsel %vm822, %v850, %v849
      %v852 = vrot.slane %v800, 6
      %v853 = vsel %vm825, %v852, %v851
      %v854 = vrot.slane %v802, 5
      %v855 = vsel %vm828, %v854, %v853
      %v856 = vrot.slane %v804, 4
      %v857 = vsel %vm831, %v856, %v855
      %v858 = vrot.slane %v806, 3
      %v859 = vsel %vm834, %v858, %v857
      %v860 = vrot.slane %v808, 2
      %v861 = vsel %vm837, %v860, %v859
      %862 = vrot.lane.b32.xlu0 %v861, 64
      %v863 = vpop.permute.xlu0 %862
      %v865 = vrot.slane %v794, 3
      %v866 = vrot.slane %v796, 2
      %v867 = vsel %vm819, %v866, %v865
      %v868 = vrot.slane %v798, 1
      %v869 = vsel %vm822, %v868, %v867
      %v870 = vsel %vm825, %v800, %v869
      %v871 = vrot.slane %v802, 7
      %v872 = vsel %vm828, %v871, %v870
      %v873 = vrot.slane %v804, 6
      %v874 = vsel %vm831, %v873, %v872
      %v875 = vrot.slane %v806, 5
      %v876 = vsel %vm834, %v875, %v874
      %v877 = vrot.slane %v808, 4
      %v878 = vsel %vm837, %v877, %v876
      %v880 = vrot.slane %v794, 5
      %v881 = vrot.slane %v796, 4
      %v882 = vsel %vm819, %v881, %v880
      %v883 = vrot.slane %v798, 3
      %v884 = vsel %vm822, %v883, %v882
      %v885 = vrot.slane %v800, 2
      %v886 = vsel %vm825, %v885, %v884
      %v887 = vrot.slane %v802, 1
      %v888 = vsel %vm828, %v887, %v886
      %v889 = vsel %vm831, %v804, %v888
      %v890 = vrot.slane %v806, 7
      %v891 = vsel %vm834, %v890, %v889
      %v892 = vrot.slane %v808, 6
      %v893 = vsel %vm837, %v892, %v891
      %894 = vrot.lane.b32.xlu0 %v893, 64
      %v895 = vpop.permute.xlu0 %894
      %v897 = vrot.slane %v794, 7
      %v898 = vrot.slane %v796, 6
      %v899 = vsel %vm819, %v898, %v897
      %v900 = vrot.slane %v798, 5
      %v901 = vsel %vm822, %v900, %v899
      %v902 = vrot.slane %v800, 4
      %v903 = vsel %vm825, %v902, %v901
      %v904 = vrot.slane %v802, 3
      %v905 = vsel %vm828, %v904, %v903
      %v906 = vrot.slane %v804, 2
      %v907 = vsel %vm831, %v906, %v905
      %v908 = vrot.slane %v806, 1
      %v909 = vsel %vm834, %v908, %v907
      %v910 = vsel %vm837, %v808, %v909
      %v920 = vrot.slane %v795, 1
      %v921 = vsel %vm819, %v797, %v920
      %v922 = vrot.slane %v799, 7
      %v923 = vsel %vm822, %v922, %v921
      %v924 = vrot.slane %v801, 6
      %v925 = vsel %vm825, %v924, %v923
      %v926 = vrot.slane %v803, 5
      %v927 = vsel %vm828, %v926, %v925
      %v928 = vrot.slane %v805, 4
      %v929 = vsel %vm831, %v928, %v927
      %v930 = vrot.slane %v807, 3
      %v931 = vsel %vm834, %v930, %v929
      %v932 = vrot.slane %v809, 2
      %v933 = vsel %vm837, %v932, %v931
      %934 = vrot.lane.b32.xlu0 %v933, 64
      %v935 = vpop.permute.xlu0 %934
      %v937 = vrot.slane %v795, 3
      %v938 = vrot.slane %v797, 2
      %v939 = vsel %vm819, %v938, %v937
      %v940 = vrot.slane %v799, 1
      %v941 = vsel %vm822, %v940, %v939
      %v942 = vsel %vm825, %v801, %v941
      %v943 = vrot.slane %v803, 7
      %v944 = vsel %vm828, %v943, %v942
      %v945 = vrot.slane %v805, 6
      %v946 = vsel %vm831, %v945, %v944
      %v947 = vrot.slane %v807, 5
      %v948 = vsel %vm834, %v947, %v946
      %v949 = vrot.slane %v809, 4
      %v950 = vsel %vm837, %v949, %v948
      %v952 = vrot.slane %v795, 5
      %v953 = vrot.slane %v797, 4
      %v954 = vsel %vm819, %v953, %v952
      %v955 = vrot.slane %v799, 3
      %v956 = vsel %vm822, %v955, %v954
      %v957 = vrot.slane %v801, 2
      %v958 = vsel %vm825, %v957, %v956
      %v959 = vrot.slane %v803, 1
      %v960 = vsel %vm828, %v959, %v958
      %v961 = vsel %vm831, %v805, %v960
      %v962 = vrot.slane %v807, 7
      %v963 = vsel %vm834, %v962, %v961
      %v964 = vrot.slane %v809, 6
      %v965 = vsel %vm837, %v964, %v963
      %966 = vrot.lane.b32.xlu0 %v965, 64
      %v967 = vpop.permute.xlu0 %966
      %vm969 = vcmask 523264
      %v970 = vsel %vm969, %v838, %v863
      %v971 = vsel %vm969, %v878, %v895
      %v972 = vsel %vm969, %v910, %v935
      %v973 = vsel %vm969, %v950, %v967
      %974 = vst [vmem:[%s148] sm:$0xff] %v970
      %975 = vst [vmem:[%s148 + $0x8] sm:$0xff] %v971
      %976 = vst [vmem:[%s148 + $0x10] sm:$0xff] %v972
      %977 = vst [vmem:[%s148 + $0x18] sm:$0xff] %v973
      %p978 = scmp.lt.s32.totalorder %s13, 1
      %s979 = scalar_select %p978, %s13, 1
      %s980 = smul.addr %s979, 4
      %s981 = smul.addr %s980, 8
      %s982 = scalar_lea.vmem %s2, %s981
      // Predicated region
      $region29: #{new_model_forward.1} parent=27 // pred_check
        %p983 = pneg %p78
      $region30: #{new_model_forward.1} parent=27 // pred_check_branch
        %985 = sbr.rel (%p983) target = $region32
      $region31: #{new_model_forward.1} parent=27 // pred_region
        _
      $region32: #{new_model_forward.1} parent=27 // pred_fallthru
        _
    $region28: #{new_model_forward.1} parent=5 // pred_fallthru
      _
    %p986 = scmp.le.s32.totalorder 2, %s8
    // Predicated region
    $region33: #{new_model_forward.1} parent=5 // pred_check
      %p987 = pneg %p986
    $region34: #{new_model_forward.1} parent=5 // pred_check_branch
      %989 = sbr.rel (%p987) target = $region36
    $region35: #{new_model_forward.1} parent=5 // pred_region
      %s990 = ssub.s32 %s8, 2
      // Predicated region
      $region37: #{new_model_forward.1} parent=35 // pred_check
        %p991 = pneg %p84
      $region38: #{new_model_forward.1} parent=35 // pred_check_branch
        %993 = sbr.rel (%p991) target = $region40
      $region39: #{new_model_forward.1} parent=35 // pred_region
        %p994 = scmp.lt.s32.totalorder %s14, 1
        %s995 = scalar_select %p994, %s14, 1
        %s996 = smul.addr %s995, 4
        %s997 = smul.addr %s996, 8
        %s998 = scalar_lea.vmem %s2, %s997
      $region40: #{new_model_forward.1} parent=35 // pred_fallthru
        _
    $region36: #{new_model_forward.1} parent=5 // pred_fallthru
      _
  $region6: #{new_model_forward.1} parent=0 // loop_footer
    %s12 = sadd.s32 1, %s8
  $region7: #{new_model_forward.1} parent=0 // loop_footer_branch
    %7 = sbr.rel target = $region3
  $region8: #{new_model_forward.1} parent=0 // loop_exit
    _

</llo_original>
